<compile_context>
chip_gen: v7x
topology: tpu7x:2x2x1
jax: 0.10.0
libtpu: 0.0.40
codegen_flags: <defaults>
</compile_context>

<pallas_src>
import functools

import jax
import jax.numpy as jnp
from jax.experimental import pallas as pl
from jax.experimental.pallas import tpu as pltpu

LANE = 128          # lane width (last-dim tile)
SUBLANE_BF16 = 16   # bf16 sublane packing (second-to-last-dim tile)


def _round_up(x, m):
    return ((x + m - 1) // m) * m


def _tensorcores_per_chip() -> int:
    """2 TensorCores per chip on v4/v5p/v7x-class parts, else 1 (v5e/v6e)."""
    try:
        kind = jax.devices()[0].device_kind.lower()
    except Exception:
        return 1
    return 2 if any(tag in kind for tag in ("v4", "v5p", "7x")) else 1


# ------------------------------------------------------------------------ kernel
def fcn_kernel(x_ref, *refs, num_layers, act_flags):
    """Fused MLP forward on one (TM, d_in_pad) row-block of the batch.

    refs = (W_0, ..., W_{L-1}, B, out)
      W_i : (k_i, n_i)     bf16, zero-padded, lane-dense (n_i % 128 == 0)
      B   : (L, max_n)     f32,  row i = zero-padded bias of layer i
      out : (TM, n_{L-1})  f32,  lane-dense output block
    """
    b_ref = refs[num_layers]
    out_ref = refs[num_layers + 1]

    h = x_ref[...].astype(jnp.bfloat16)                    # (TM, d_in_pad)
    for i in range(num_layers):                            # static unroll
        w = refs[i][...]                                   # (k_i, n_i) bf16
        n_i = w.shape[1]
        # bf16 operands, f32 accumulation on the MXU; bias add / ReLU in f32.
        acc = jnp.dot(h, w, preferred_element_type=jnp.float32)
        acc = acc + b_ref[i:i + 1, :n_i]                   # (1, n_i) broadcast
        if act_flags[i]:
            acc = jnp.maximum(acc, 0.0)
        # nn.Dropout is identity in eval/inference mode.
        if i < num_layers - 1:
            h = acc.astype(jnp.bfloat16)                   # operand for next MXU pass
        else:
            out_ref[...] = acc.astype(out_ref.dtype)


# ------------------------------------------------------------------ param prep
def prepare_fcn_params(weights, biases):
    """One-time padding + bf16 casting of FCN parameters (hoisted out of forward).

    Returns (w_padded, bias_stack):
      w_padded  : tuple of L bf16 arrays, layer i shaped (k_i, n_i) with
                  k_0 = round_up(input_dim, 16), k_i = n_{i-1},
                  n_i = round_up(out_features_i, 128)   (last layer included).
      bias_stack: (L, max_i n_i) f32, row i = zero-padded bias of layer i.
    """
    num_layers = len(weights)
    d_in = weights[0].shape[0]
    prev_p = _round_up(d_in, SUBLANE_BF16)
    w_padded, n_pads = [], []
    for w in weights:
        din, dout = w.shape
        dout_p = _round_up(dout, LANE)
        wp = jnp.zeros((prev_p, dout_p), jnp.float32).at[:din, :dout].set(w)
        w_padded.append(wp.astype(jnp.bfloat16))           # bf16: half DMA / VMEM
        n_pads.append(dout_p)
        prev_p = dout_p
    max_n = max(n_pads)
    bias_stack = jnp.zeros((num_layers, max_n), jnp.float32)
    for i, b in enumerate(biases):
        bias_stack = bias_stack.at[i, :b.shape[0]].set(b)
    return tuple(w_padded), bias_stack


# --------------------------------------------------------------------- forward
@functools.partial(jax.jit, static_argnames=("out_dim", "h_activ_relu", "block_m"))
def fcn_forward(x, w_padded, bias_stack, *, out_dim, h_activ_relu=True, block_m=256):
    """x: (N, input_dim) f32; (w_padded, bias_stack) from prepare_fcn_params."""
    N, d_in = x.shape
    num_layers = len(w_padded)
    d_in_pad = w_padded[0].shape[0]
    out_dim_pad = w_padded[-1].shape[1]

    x_p = x.astype(jnp.float32)
    if d_in_pad != d_in:                                    # pad features to bf16 sublane tile
        x_p = jnp.pad(x_p, ((0, 0), (0, d_in_pad - d_in)))

    # Row-block size: collapse the grid on single-TC chips, split across both
    # TensorCores on 2-TC chips; cap at block_m (vreg-budget sweet spot 128-256).
    n_tc = _tensorcores_per_chip()
    TM = min(block_m, _round_up(pl.cdiv(N, n_tc), 8))
    grid = (pl.cdiv(N, TM),)            # partial last block handled by Pallas

    act_flags = tuple(h_activ_relu and (i != num_layers - 1)
                      for i in range(num_layers))

    resident = dict(pipeline_mode=pl.Buffered(1))   # grid-invariant: single buffer
    in_specs = [pl.BlockSpec((TM, d_in_pad), lambda i: (i, 0))]
    in_specs += [pl.BlockSpec(w.shape, lambda i: (0, 0), **resident) for w in w_padded]
    in_specs += [pl.BlockSpec(bias_stack.shape, lambda i: (0, 0), **resident)]

    kernel = functools.partial(fcn_kernel, num_layers=num_layers, act_flags=act_flags)

    out = pl.pallas_call(
        kernel,
        out_shape=jax.ShapeDtypeStruct((N, out_dim_pad), jnp.float32),
        grid=grid,
        in_specs=in_specs,
        out_specs=pl.BlockSpec((TM, out_dim_pad), lambda i: (i, 0)),
        compiler_params=pltpu.CompilerParams(
            dimension_semantics=("parallel",),          # megacore split on 2-TC chips
            vmem_limit_bytes=32 * 1024 * 1024),
    )(x_p, *w_padded, bias_stack)

    return out[:, :out_dim]


# ------------------------------------------------------------------- reference
def fcn_reference(x, weights, biases, *, h_activ_relu=True, bf16_matmul=False):
    """Pure-JAX replica of the PyTorch FCN forward (eval mode)."""
    h = x.astype(jnp.float32)
    n = len(weights)
    for i, (w, b) in enumerate(zip(weights, biases)):
        if bf16_matmul:
            h = jnp.dot(h.astype(jnp.bfloat16), w.astype(jnp.bfloat16),
                        preferred_element_type=jnp.float32) + b[None, :]
        else:
            h = jnp.dot(h, w) + b[None, :]
        if h_activ_relu and i != n - 1:
            h = jnp.maximum(h, 0.0)
    return h


# ------------------------------------------------------------------------ main
if __name__ == "__main__":
    # FCN(input_dim=4, out_dim=8, h_dims=[32, 16], h_activ=nn.ReLU(),
    #     batch_norm=False, dropout=0.2) in eval mode; batch of 256 samples.
    N = 256
    INPUT_DIM, H_DIMS, OUT_DIM = 4, [32, 16], 8
    layer_dims = [INPUT_DIM] + H_DIMS + [OUT_DIM]
    n_layers = len(layer_dims) - 1

    key = jax.random.PRNGKey(0)
    keys = jax.random.split(key, 1 + 2 * n_layers)
    x = jax.random.normal(keys[0], (N, INPUT_DIM), jnp.float32)

    weights, biases = [], []
    for i in range(n_layers):
        bound = 1.0 / float(layer_dims[i]) ** 0.5           # nn.Linear default init
        w = jax.random.uniform(keys[1 + 2 * i],
                               (layer_dims[i], layer_dims[i + 1]),
                               jnp.float32, -bound, bound)
        b = jax.random.uniform(keys[2 + 2 * i],
                               (layer_dims[i + 1],),
                               jnp.float32, -bound, bound)
        weights.append(w)
        biases.append(b)

    # One-time parameter preparation (hoisted out of the per-call path).
    w_padded, bias_stack = prepare_fcn_params(weights, biases)

    out = fcn_forward(x, w_padded, bias_stack, out_dim=OUT_DIM, h_activ_relu=True)
    out = jax.block_until_ready(out)
    assert out.shape == (N, OUT_DIM), out.shape

    # Matched-precision reference (bf16 operands, f32 accumulation) — tight check.
    ref_bf16 = fcn_reference(x, weights, biases, h_activ_relu=True, bf16_matmul=True)
    # Full f32 reference — semantic check with loose tolerance for bf16 matmuls.
    ref_f32 = fcn_reference(x, weights, biases, h_activ_relu=True, bf16_matmul=False)

    err_m = jnp.max(jnp.abs(out - ref_bf16))
    err_f = jnp.max(jnp.abs(out - ref_f32))
    assert jnp.allclose(out, ref_bf16, atol=1e-3, rtol=1e-3), f"matched-precision err {err_m}"
    assert jnp.allclose(out, ref_f32, atol=5e-2, rtol=5e-2), f"f32-reference err {err_f}"
    print("KERNEL_OK")
</pallas_src>

<mosaic_0001>
module attributes {stable_mosaic.version = 11 : i64} {
  func.func @fcn_kernel(%arg0: i32, %arg1: memref<256x16xf32, #tpu.memory_space<vmem>>, %arg2: memref<16x128xbf16, #tpu.memory_space<vmem>>, %arg3: memref<128x128xbf16, #tpu.memory_space<vmem>>, %arg4: memref<128x128xbf16, #tpu.memory_space<vmem>>, %arg5: memref<3x128xf32, #tpu.memory_space<vmem>>, %arg6: memref<256x128xf32, #tpu.memory_space<vmem>>) attributes {dimension_semantics = [#tpu.dimension_semantics<parallel>], iteration_bounds = array<i64: 1>, scalar_prefetch = 0 : i64, scratch_operands = 0 : i64, tpu.core_type = #tpu.core_type<tc>, window_params = [{transform_indices = @transform_0, window_bounds = array<i64: 256, 16>}, {pipeline_mode = #tpu.pipeline_mode<synchronous>, transform_indices = @transform_1, window_bounds = array<i64: 16, 128>}, {pipeline_mode = #tpu.pipeline_mode<synchronous>, transform_indices = @transform_2, window_bounds = array<i64: 128, 128>}, {pipeline_mode = #tpu.pipeline_mode<synchronous>, transform_indices = @transform_3, window_bounds = array<i64: 128, 128>}, {pipeline_mode = #tpu.pipeline_mode<synchronous>, transform_indices = @transform_4, window_bounds = array<i64: 3, 128>}, {transform_indices = @transform_5, window_bounds = array<i64: 256, 128>}]} {
    %c0 = arith.constant 0 : index
    %c0_0 = arith.constant 0 : index
    %0 = vector.load %arg1[%c0, %c0_0] : memref<256x16xf32, #tpu.memory_space<vmem>>, vector<256x16xf32>
    %1 = arith.truncf %0 : vector<256x16xf32> to vector<256x16xbf16>
    %c0_1 = arith.constant 0 : index
    %c0_2 = arith.constant 0 : index
    %2 = vector.load %arg2[%c0_1, %c0_2] : memref<16x128xbf16, #tpu.memory_space<vmem>>, vector<16x128xbf16>
    %cst = arith.constant dense<0.000000e+00> : vector<256x128xf32>
    %3 = tpu.matmul %1, %2, %cst {dimension_numbers = #tpu.dot_dimension_numbers<[1], [0], [0], [1], [0, 0, 1, 1], [], []>} : vector<256x16xbf16>, vector<16x128xbf16>, vector<256x128xf32> -> vector<256x128xf32>
    %c0_3 = arith.constant 0 : index
    %c0_4 = arith.constant 0 : index
    %4 = vector.load %arg5[%c0_3, %c0_4] : memref<3x128xf32, #tpu.memory_space<vmem>>, vector<1x128xf32>
    %5 = vector.broadcast %4 : vector<1x128xf32> to vector<256x128xf32>
    %6 = arith.addf %3, %5 : vector<256x128xf32>
    %cst_5 = arith.constant 0.000000e+00 : f32
    %7 = vector.broadcast %cst_5 : f32 to vector<256x128xf32>
    %8 = arith.maximumf %6, %7 : vector<256x128xf32>
    %9 = arith.truncf %8 : vector<256x128xf32> to vector<256x128xbf16>
    %c0_6 = arith.constant 0 : index
    %c0_7 = arith.constant 0 : index
    %10 = vector.load %arg3[%c0_6, %c0_7] : memref<128x128xbf16, #tpu.memory_space<vmem>>, vector<128x128xbf16>
    %cst_8 = arith.constant dense<0.000000e+00> : vector<256x128xf32>
    %11 = tpu.matmul %9, %10, %cst_8 {dimension_numbers = #tpu.dot_dimension_numbers<[1], [0], [0], [1], [0, 0, 1, 1], [], []>} : vector<256x128xbf16>, vector<128x128xbf16>, vector<256x128xf32> -> vector<256x128xf32>
    %c1 = arith.constant 1 : index
    %c0_9 = arith.constant 0 : index
    %12 = vector.load %arg5[%c1, %c0_9] : memref<3x128xf32, #tpu.memory_space<vmem>>, vector<1x128xf32>
    %13 = vector.broadcast %12 : vector<1x128xf32> to vector<256x128xf32>
    %14 = arith.addf %11, %13 : vector<256x128xf32>
    %cst_10 = arith.constant 0.000000e+00 : f32
    %15 = vector.broadcast %cst_10 : f32 to vector<256x128xf32>
    %16 = arith.maximumf %14, %15 : vector<256x128xf32>
    %17 = arith.truncf %16 : vector<256x128xf32> to vector<256x128xbf16>
    %c0_11 = arith.constant 0 : index
    %c0_12 = arith.constant 0 : index
    %18 = vector.load %arg4[%c0_11, %c0_12] : memref<128x128xbf16, #tpu.memory_space<vmem>>, vector<128x128xbf16>
    %cst_13 = arith.constant dense<0.000000e+00> : vector<256x128xf32>
    %19 = tpu.matmul %17, %18, %cst_13 {dimension_numbers = #tpu.dot_dimension_numbers<[1], [0], [0], [1], [0, 0, 1, 1], [], []>} : vector<256x128xbf16>, vector<128x128xbf16>, vector<256x128xf32> -> vector<256x128xf32>
    %c2 = arith.constant 2 : index
    %c0_14 = arith.constant 0 : index
    %20 = vector.load %arg5[%c2, %c0_14] : memref<3x128xf32, #tpu.memory_space<vmem>>, vector<1x128xf32>
    %21 = vector.broadcast %20 : vector<1x128xf32> to vector<256x128xf32>
    %22 = arith.addf %19, %21 : vector<256x128xf32>
    %c0_15 = arith.constant 0 : index
    %c0_16 = arith.constant 0 : index
    %23 = vector.load %arg6[%c0_15, %c0_16] : memref<256x128xf32, #tpu.memory_space<vmem>>, vector<256x128xf32>
    tpu.vector_store %arg6[%c0_15, %c0_16], %22 {strides = array<i32>} : memref<256x128xf32, #tpu.memory_space<vmem>>, vector<256x128xf32>,
    return
  }
  func.func @transform_0(%arg0: i32) -> (i32, i32) {
    %c0_i32 = arith.constant 0 : i32
    %c0_i32_0 = arith.constant 0 : i32
    return %arg0, %c0_i32 : i32, i32
  }
  func.func @transform_1(%arg0: i32) -> (i32, i32) {
    %c0_i32 = arith.constant 0 : i32
    %c0_i32_0 = arith.constant 0 : i32
    %c0_i32_1 = arith.constant 0 : i32
    return %c0_i32, %c0_i32_0 : i32, i32
  }
  func.func @transform_2(%arg0: i32) -> (i32, i32) {
    %c0_i32 = arith.constant 0 : i32
    %c0_i32_0 = arith.constant 0 : i32
    %c0_i32_1 = arith.constant 0 : i32
    return %c0_i32, %c0_i32_0 : i32, i32
  }
  func.func @transform_3(%arg0: i32) -> (i32, i32) {
    %c0_i32 = arith.constant 0 : i32
    %c0_i32_0 = arith.constant 0 : i32
    %c0_i32_1 = arith.constant 0 : i32
    return %c0_i32, %c0_i32_0 : i32, i32
  }
  func.func @transform_4(%arg0: i32) -> (i32, i32) {
    %c0_i32 = arith.constant 0 : i32
    %c0_i32_0 = arith.constant 0 : i32
    %c0_i32_1 = arith.constant 0 : i32
    return %c0_i32, %c0_i32_0 : i32, i32
  }
  func.func @transform_5(%arg0: i32) -> (i32, i32) {
    %c0_i32 = arith.constant 0 : i32
    %c0_i32_0 = arith.constant 0 : i32
    return %arg0, %c0_i32 : i32, i32
  }
}

</mosaic_0001>

<llo_original>
// kernel: fcn_forward.1
$region0: #{fcn_forward.1}
  #allocation0 [shape = 'u32[]', space=smem, size = 0x4, offset = 0x4, fixed_abs, tag = 'smem constant byte address 0x4 - core index']
  #allocation1 [shape = 'u32[144,128]{1,0:T(1,128)}', space=vmem, size = 0x12000, scoped, tag = 'internal scratch']
  %s0 = inlined_call_operand.vmem [shape: f32[256,16], index: 0, kind: input, shape index: {}]
  %s1 = inlined_call_operand.vmem [shape: bf16[16,128], index: 1, kind: input, shape index: {}]
  %s2 = inlined_call_operand.vmem [shape: bf16[128,128], index: 2, kind: input, shape index: {}]
  %s3 = inlined_call_operand.vmem [shape: bf16[128,128], index: 3, kind: input, shape index: {}]
  %s4 = inlined_call_operand.vmem [shape: f32[3,128], index: 4, kind: input, shape index: {}]
  %s5 = inlined_call_operand.vmem [shape: f32[256,128], index: 5, kind: output, shape index: {}]
  %s6 = sld [smem:[#allocation0]]
  $region30: #{fcn_forward.1} parent=0
    _
  %s8 = ssub.s32 1, %s6
  %s9 = scalar_select 0, %s8, %s6
  // Predicated region
  $region2: #{fcn_forward.1} parent=0 // pred_check
    _
  $region3: #{fcn_forward.1} parent=0 // pred_check_branch
    %11 = sbr.rel (0) target = $region5
  $region4: #{fcn_forward.1} parent=0 // pred_region
    _
  $region5: #{fcn_forward.1} parent=0 // pred_fallthru
    _
  // Predicated region
  $region6: #{fcn_forward.1} parent=0 // pred_check
    _
  $region7: #{fcn_forward.1} parent=0 // pred_check_branch
    %13 = sbr.rel (0) target = $region9
  $region8: #{fcn_forward.1} parent=0 // pred_region
    _
  $region9: #{fcn_forward.1} parent=0 // pred_fallthru
    _
  // Predicated region
  $region10: #{fcn_forward.1} parent=0 // pred_check
    _
  $region11: #{fcn_forward.1} parent=0 // pred_check_branch
    %15 = sbr.rel (0) target = $region13
  $region12: #{fcn_forward.1} parent=0 // pred_region
    _
  $region13: #{fcn_forward.1} parent=0 // pred_fallthru
    _
  // Predicated region
  $region14: #{fcn_forward.1} parent=0 // pred_check
    _
  $region15: #{fcn_forward.1} parent=0 // pred_check_branch
    %17 = sbr.rel (0) target = $region17
  $region16: #{fcn_forward.1} parent=0 // pred_region
    _
  $region17: #{fcn_forward.1} parent=0 // pred_fallthru
    _
  // Predicated region
  $region18: #{fcn_forward.1} parent=0 // pred_check
    _
  $region19: #{fcn_forward.1} parent=0 // pred_check_branch
    %19 = sbr.rel (0) target = $region21
  $region20: #{fcn_forward.1} parent=0 // pred_region
    _
  $region21: #{fcn_forward.1} parent=0 // pred_fallthru
    _
  %v21 = vld [vmem:[%s0] sm:$0xff]
  %v22 = vld [vmem:[%s0 + $0x8] sm:$0xff]
  %v23 = vld [vmem:[%s0 + $0x10] sm:$0xff]
  %v24 = vld [vmem:[%s0 + $0x18] sm:$0xff]
  %v25 = vld [vmem:[%s0 + $0x20] sm:$0xff]
  %v26 = vld [vmem:[%s0 + $0x28] sm:$0xff]
  %v27 = vld [vmem:[%s0 + $0x30] sm:$0xff]
  %v28 = vld [vmem:[%s0 + $0x38] sm:$0xff]
  %v29 = vld [vmem:[%s0 + $0x40] sm:$0xff]
  %v30 = vld [vmem:[%s0 + $0x48] sm:$0xff]
  %v31 = vld [vmem:[%s0 + $0x50] sm:$0xff]
  %v32 = vld [vmem:[%s0 + $0x58] sm:$0xff]
  %v33 = vld [vmem:[%s0 + $0x60] sm:$0xff]
  %v34 = vld [vmem:[%s0 + $0x68] sm:$0xff]
  %v35 = vld [vmem:[%s0 + $0x70] sm:$0xff]
  %v36 = vld [vmem:[%s0 + $0x78] sm:$0xff]
  %v37 = vld [vmem:[%s0 + $0x80] sm:$0xff]
  %v38 = vld [vmem:[%s0 + $0x88] sm:$0xff]
  %v39 = vld [vmem:[%s0 + $0x90] sm:$0xff]
  %v40 = vld [vmem:[%s0 + $0x98] sm:$0xff]
  %v41 = vld [vmem:[%s0 + $0xa0] sm:$0xff]
  %v42 = vld [vmem:[%s0 + $0xa8] sm:$0xff]
  %v43 = vld [vmem:[%s0 + $0xb0] sm:$0xff]
  %v44 = vld [vmem:[%s0 + $0xb8] sm:$0xff]
  %v45 = vld [vmem:[%s0 + $0xc0] sm:$0xff]
  %v46 = vld [vmem:[%s0 + $0xc8] sm:$0xff]
  %v47 = vld [vmem:[%s0 + $0xd0] sm:$0xff]
  %v48 = vld [vmem:[%s0 + $0xd8] sm:$0xff]
  %v49 = vld [vmem:[%s0 + $0xe0] sm:$0xff]
  %v50 = vld [vmem:[%s0 + $0xe8] sm:$0xff]
  %v51 = vld [vmem:[%s0 + $0xf0] sm:$0xff]
  %v52 = vld [vmem:[%s0 + $0xf8] sm:$0xff]
  %v53 = vpack.c.bf16 %v22, %v21
  %v54 = vpack.c.bf16 %v24, %v23
  %v55 = vpack.c.bf16 %v26, %v25
  %v56 = vpack.c.bf16 %v28, %v27
  %v57 = vpack.c.bf16 %v30, %v29
  %v58 = vpack.c.bf16 %v32, %v31
  %v59 = vpack.c.bf16 %v34, %v33
  %v60 = vpack.c.bf16 %v36, %v35
  %v61 = vpack.c.bf16 %v38, %v37
  %v62 = vpack.c.bf16 %v40, %v39
  %v63 = vpack.c.bf16 %v42, %v41
  %v64 = vpack.c.bf16 %v44, %v43
  %v65 = vpack.c.bf16 %v46, %v45
  %v66 = vpack.c.bf16 %v48, %v47
  %v67 = vpack.c.bf16 %v50, %v49
  %v68 = vpack.c.bf16 %v52, %v51
  %v69 = vld [vmem:[%s1] sm:$0xf]
  %v70 = vld [vmem:[%s1 + $0x4] sm:$0xf]
  %v71 = vld [vmem:[%s4] sm:$0x1]
  %v72 = vlaneseq
  %v73 = vshrl.u32 %v72, 7
  %v74 = vsub.s32 0, %v73
  %v75 = vrot.slane %v71, %v74
  %v78 = vunpack.c.l.b16 %v69
  %v79 = vunpack.c.l.b16 %v70
  %v80 = vpack.c.b16 %v79, %v78
  %vm82 = vcmask 130048
  %v84 = vsel %vm82, %v53, 0
  %v87 = vsel %vm82, %v54, 0
  %v90 = vsel %vm82, %v55, 0
  %v93 = vsel %vm82, %v56, 0
  %v96 = vsel %vm82, %v57, 0
  %v99 = vsel %vm82, %v58, 0
  %v102 = vsel %vm82, %v59, 0
  %v105 = vsel %vm82, %v60, 0
  %v108 = vsel %vm82, %v61, 0
  %v111 = vsel %vm82, %v62, 0
  %v114 = vsel %vm82, %v63, 0
  %v117 = vsel %vm82, %v64, 0
  %v120 = vsel %vm82, %v65, 0
  %v123 = vsel %vm82, %v66, 0
  %v126 = vsel %vm82, %v67, 0
  %v129 = vsel %vm82, %v68, 0
  %131 = vmatprep.subr.bf16.mxu0 0
  %132 = vmatpush1.bf16.msra.mxu0 %v80
  %133 = vmatprep.subr.bf16.mxu0 0
  %134 = vmatpush1.bf16.msra.mxu0 0
  %135 = vmatprep.subr.bf16.mxu0 0
  %136 = vmatpush1.bf16.msra.mxu0 0
  %137 = vmatprep.subr.bf16.mxu0 0
  %138 = vmatpush1.bf16.msra.mxu0 0
  %139 = vmatprep.subr.bf16.mxu0 0
  %140 = vmatpush1.bf16.msra.mxu0 0
  %141 = vmatprep.subr.bf16.mxu0 0
  %142 = vmatpush1.bf16.msra.mxu0 0
  %143 = vmatprep.subr.bf16.mxu0 0
  %144 = vmatpush1.bf16.msra.mxu0 0
  %145 = vmatprep.subr.bf16.mxu0 0
  %146 = vmatpush1.bf16.msra.mxu0 0
  %147 = vmatprep.subr.bf16.mxu0 0
  %148 = vmatpush1.bf16.msra.mxu0 0
  %149 = vmatprep.subr.bf16.mxu0 0
  %150 = vmatpush1.bf16.msra.mxu0 0
  %151 = vmatprep.subr.bf16.mxu0 0
  %152 = vmatpush1.bf16.msra.mxu0 0
  %153 = vmatprep.subr.bf16.mxu0 0
  %154 = vmatpush1.bf16.msra.mxu0 0
  %155 = vmatprep.subr.bf16.mxu0 0
  %156 = vmatpush1.bf16.msra.mxu0 0
  %157 = vmatprep.subr.bf16.mxu0 0
  %158 = vmatpush1.bf16.msra.mxu0 0
  %159 = vmatprep.subr.bf16.mxu0 0
  %160 = vmatpush1.bf16.msra.mxu0 0
  %161 = vmatprep.subr.bf16.mxu0 0
  %162 = vmatpush1.bf16.msra.mxu0 0
  %163 = vmatprep.mubr.bf16.mxu0 0
  %164 = vmatmul.mubr.bf16.gmra.mrb[0].mxu0 %v84
  %v165 = vpop.f32.mrb[0].mxu0
  %v166 = vadd.f32 %v75, %v165
  %v167 = vpop.f32.mrb[0].mxu0
  %v168 = vpop.f32.mrb[0].mxu0
  %v169 = vadd.f32 %v75, %v168
  %v170 = vpop.f32.mrb[0].mxu0
  %171 = vmatprep.mubr.bf16.mxu0 0
  %172 = vmatmul.mubr.bf16.gmra.mrb[0].mxu0 %v87
  %v173 = vpop.f32.mrb[0].mxu0
  %v174 = vadd.f32 %v75, %v173
  %v175 = vpop.f32.mrb[0].mxu0
  %v176 = vpop.f32.mrb[0].mxu0
  %v177 = vadd.f32 %v75, %v176
  %v178 = vpop.f32.mrb[0].mxu0
  %179 = vmatprep.mubr.bf16.mxu0 0
  %180 = vmatmul.mubr.bf16.gmra.mrb[0].mxu0 %v90
  %v181 = vpop.f32.mrb[0].mxu0
  %v182 = vadd.f32 %v75, %v181
  %v183 = vpop.f32.mrb[0].mxu0
  %v184 = vpop.f32.mrb[0].mxu0
  %v185 = vadd.f32 %v75, %v184
  %v186 = vpop.f32.mrb[0].mxu0
  %187 = vmatprep.mubr.bf16.mxu0 0
  %188 = vmatmul.mubr.bf16.gmra.mrb[0].mxu0 %v93
  %v189 = vpop.f32.mrb[0].mxu0
  %v190 = vadd.f32 %v75, %v189
  %v191 = vpop.f32.mrb[0].mxu0
  %v192 = vpop.f32.mrb[0].mxu0
  %v193 = vadd.f32 %v75, %v192
  %v194 = vpop.f32.mrb[0].mxu0
  %195 = vmatprep.mubr.bf16.mxu0 0
  %196 = vmatmul.mubr.bf16.gmra.mrb[0].mxu0 %v96
  %v197 = vpop.f32.mrb[0].mxu0
  %v198 = vadd.f32 %v75, %v197
  %v199 = vpop.f32.mrb[0].mxu0
  %v200 = vpop.f32.mrb[0].mxu0
  %v201 = vadd.f32 %v75, %v200
  %v202 = vpop.f32.mrb[0].mxu0
  %203 = vmatprep.mubr.bf16.mxu0 0
  %204 = vmatmul.mubr.bf16.gmra.mrb[0].mxu0 %v99
  %v205 = vpop.f32.mrb[0].mxu0
  %v206 = vadd.f32 %v75, %v205
  %v207 = vpop.f32.mrb[0].mxu0
  %v208 = vpop.f32.mrb[0].mxu0
  %v209 = vadd.f32 %v75, %v208
  %v210 = vpop.f32.mrb[0].mxu0
  %211 = vmatprep.mubr.bf16.mxu0 0
  %212 = vmatmul.mubr.bf16.gmra.mrb[0].mxu0 %v102
  %v213 = vpop.f32.mrb[0].mxu0
  %v214 = vadd.f32 %v75, %v213
  %v215 = vpop.f32.mrb[0].mxu0
  %v216 = vpop.f32.mrb[0].mxu0
  %v217 = vadd.f32 %v75, %v216
  %v218 = vpop.f32.mrb[0].mxu0
  %219 = vmatprep.mubr.bf16.mxu0 0
  %220 = vmatmul.mubr.bf16.gmra.mrb[0].mxu0 %v105
  %v221 = vpop.f32.mrb[0].mxu0
  %v222 = vadd.f32 %v75, %v221
  %v223 = vpop.f32.mrb[0].mxu0
  %v224 = vpop.f32.mrb[0].mxu0
  %v225 = vadd.f32 %v75, %v224
  %v226 = vpop.f32.mrb[0].mxu0
  %227 = vmatprep.mubr.bf16.mxu0 0
  %228 = vmatmul.mubr.bf16.gmra.mrb[0].mxu0 %v108
  %v229 = vpop.f32.mrb[0].mxu0
  %v230 = vadd.f32 %v75, %v229
  %v231 = vpop.f32.mrb[0].mxu0
  %v232 = vpop.f32.mrb[0].mxu0
  %v233 = vadd.f32 %v75, %v232
  %v234 = vpop.f32.mrb[0].mxu0
  %235 = vmatprep.mubr.bf16.mxu0 0
  %236 = vmatmul.mubr.bf16.gmra.mrb[0].mxu0 %v111
  %v237 = vpop.f32.mrb[0].mxu0
  %v238 = vadd.f32 %v75, %v237
  %v239 = vpop.f32.mrb[0].mxu0
  %v240 = vpop.f32.mrb[0].mxu0
  %v241 = vadd.f32 %v75, %v240
  %v242 = vpop.f32.mrb[0].mxu0
  %243 = vmatprep.mubr.bf16.mxu0 0
  %244 = vmatmul.mubr.bf16.gmra.mrb[0].mxu0 %v114
  %v245 = vpop.f32.mrb[0].mxu0
  %v246 = vadd.f32 %v75, %v245
  %v247 = vpop.f32.mrb[0].mxu0
  %v248 = vpop.f32.mrb[0].mxu0
  %v249 = vadd.f32 %v75, %v248
  %v250 = vpop.f32.mrb[0].mxu0
  %251 = vmatprep.mubr.bf16.mxu0 0
  %252 = vmatmul.mubr.bf16.gmra.mrb[0].mxu0 %v117
  %v253 = vpop.f32.mrb[0].mxu0
  %v254 = vadd.f32 %v75, %v253
  %v255 = vpop.f32.mrb[0].mxu0
  %v256 = vpop.f32.mrb[0].mxu0
  %v257 = vadd.f32 %v75, %v256
  %v258 = vpop.f32.mrb[0].mxu0
  %259 = vmatprep.mubr.bf16.mxu0 0
  %260 = vmatmul.mubr.bf16.gmra.mrb[0].mxu0 %v120
  %v261 = vpop.f32.mrb[0].mxu0
  %v262 = vadd.f32 %v75, %v261
  %v263 = vpop.f32.mrb[0].mxu0
  %v264 = vpop.f32.mrb[0].mxu0
  %v265 = vadd.f32 %v75, %v264
  %v266 = vpop.f32.mrb[0].mxu0
  %267 = vmatprep.mubr.bf16.mxu0 0
  %268 = vmatmul.mubr.bf16.gmra.mrb[0].mxu0 %v123
  %v269 = vpop.f32.mrb[0].mxu0
  %v270 = vadd.f32 %v75, %v269
  %v271 = vpop.f32.mrb[0].mxu0
  %v272 = vpop.f32.mrb[0].mxu0
  %v273 = vadd.f32 %v75, %v272
  %v274 = vpop.f32.mrb[0].mxu0
  %275 = vmatprep.mubr.bf16.mxu0 0
  %276 = vmatmul.mubr.bf16.gmra.mrb[0].mxu0 %v126
  %v277 = vpop.f32.mrb[0].mxu0
  %v278 = vadd.f32 %v75, %v277
  %v279 = vpop.f32.mrb[0].mxu0
  %v280 = vpop.f32.mrb[0].mxu0
  %v281 = vadd.f32 %v75, %v280
  %v282 = vpop.f32.mrb[0].mxu0
  %283 = vmatprep.mubr.bf16.mxu0 0
  %284 = vmatmul.mubr.bf16.gmra.mrb[0].mxu0 %v129
  %v285 = vpop.f32.mrb[0].mxu0
  %v286 = vadd.f32 %v75, %v285
  %v287 = vpop.f32.mrb[0].mxu0
  %v288 = vpop.f32.mrb[0].mxu0
  %v289 = vadd.f32 %v75, %v288
  %v290 = vpop.f32.mrb[0].mxu0
  %291 = vdwg.mxu0
  %v292 = vmax.f32 %v166, 0.0
  %v293 = vmax.f32 %v169, 0.0
  %v294 = vmax.f32 %v174, 0.0
  %v295 = vmax.f32 %v177, 0.0
  %v296 = vmax.f32 %v182, 0.0
  %v297 = vmax.f32 %v185, 0.0
  %v298 = vmax.f32 %v190, 0.0
  %v299 = vmax.f32 %v193, 0.0
  %v300 = vmax.f32 %v198, 0.0
  %v301 = vmax.f32 %v201, 0.0
  %v302 = vmax.f32 %v206, 0.0
  %v303 = vmax.f32 %v209, 0.0
  %v304 = vmax.f32 %v214, 0.0
  %v305 = vmax.f32 %v217, 0.0
  %v306 = vmax.f32 %v222, 0.0
  %v307 = vmax.f32 %v225, 0.0
  %v308 = vmax.f32 %v230, 0.0
  %v309 = vmax.f32 %v233, 0.0
  %v310 = vmax.f32 %v238, 0.0
  %v311 = vmax.f32 %v241, 0.0
  %v312 = vmax.f32 %v246, 0.0
  %v313 = vmax.f32 %v249, 0.0
  %v314 = vmax.f32 %v254, 0.0
  %v315 = vmax.f32 %v257, 0.0
  %v316 = vmax.f32 %v262, 0.0
  %v317 = vmax.f32 %v265, 0.0
  %v318 = vmax.f32 %v270, 0.0
  %v319 = vmax.f32 %v273, 0.0
  %v320 = vmax.f32 %v278, 0.0
  %v321 = vmax.f32 %v281, 0.0
  %v322 = vmax.f32 %v286, 0.0
  %v323 = vmax.f32 %v289, 0.0
  %v324 = vpack.c.bf16 %v293, %v292
  %v325 = vpack.c.bf16 %v295, %v294
  %v326 = vpack.c.bf16 %v297, %v296
  %v327 = vpack.c.bf16 %v299, %v298
  %v328 = vpack.c.bf16 %v301, %v300
  %v329 = vpack.c.bf16 %v303, %v302
  %v330 = vpack.c.bf16 %v305, %v304
  %v331 = vpack.c.bf16 %v307, %v306
  %v332 = vpack.c.bf16 %v309, %v308
  %v333 = vpack.c.bf16 %v311, %v310
  %v334 = vpack.c.bf16 %v313, %v312
  %v335 = vpack.c.bf16 %v315, %v314
  %v336 = vpack.c.bf16 %v317, %v316
  %v337 = vpack.c.bf16 %v319, %v318
  %v338 = vpack.c.bf16 %v321, %v320
  %v339 = vpack.c.bf16 %v323, %v322
  %v340 = vld [vmem:[%s2] sm:$0xf]
  %v341 = vld [vmem:[%s2 + $0x4] sm:$0xf]
  %v342 = vld [vmem:[%s2 + $0x8] sm:$0xf]
  %v343 = vld [vmem:[%s2 + $0xc] sm:$0xf]
  %v344 = vld [vmem:[%s2 + $0x10] sm:$0xf]
  %v345 = vld [vmem:[%s2 + $0x14] sm:$0xf]
  %v346 = vld [vmem:[%s2 + $0x18] sm:$0xf]
  %v347 = vld [vmem:[%s2 + $0x1c] sm:$0xf]
  %v348 = vld [vmem:[%s2 + $0x20] sm:$0xf]
  %v349 = vld [vmem:[%s2 + $0x24] sm:$0xf]
  %v350 = vld [vmem:[%s2 + $0x28] sm:$0xf]
  %v351 = vld [vmem:[%s2 + $0x2c] sm:$0xf]
  %v352 = vld [vmem:[%s2 + $0x30] sm:$0xf]
  %v353 = vld [vmem:[%s2 + $0x34] sm:$0xf]
  %v354 = vld [vmem:[%s2 + $0x38] sm:$0xf]
  %v355 = vld [vmem:[%s2 + $0x3c] sm:$0xf]
  %v356 = vld [vmem:[%s4 + $0x1] sm:$0x1]
  %v357 = vlaneseq
  %v358 = vshrl.u32 %v357, 7
  %v359 = vsub.s32 0, %v358
  %v360 = vrot.slane %v356, %v359
  %v377 = vunpack.c.l.b16 %v340
  %v378 = vunpack.c.l.b16 %v341
  %v379 = vunpack.c.l.b16 %v342
  %v380 = vunpack.c.l.b16 %v343
  %v381 = vunpack.c.l.b16 %v344
  %v382 = vunpack.c.l.b16 %v345
  %v383 = vunpack.c.l.b16 %v346
  %v384 = vunpack.c.l.b16 %v347
  %v385 = vunpack.c.l.b16 %v348
  %v386 = vunpack.c.l.b16 %v349
  %v387 = vunpack.c.l.b16 %v350
  %v388 = vunpack.c.l.b16 %v351
  %v389 = vunpack.c.l.b16 %v352
  %v390 = vunpack.c.l.b16 %v353
  %v391 = vunpack.c.l.b16 %v354
  %v392 = vunpack.c.l.b16 %v355
  %v393 = vpack.c.b16 %v378, %v377
  %v394 = vpack.c.b16 %v380, %v379
  %v395 = vpack.c.b16 %v382, %v381
  %v396 = vpack.c.b16 %v384, %v383
  %v397 = vpack.c.b16 %v386, %v385
  %v398 = vpack.c.b16 %v388, %v387
  %v399 = vpack.c.b16 %v390, %v389
  %v400 = vpack.c.b16 %v392, %v391
  %409 = vmatprep.subr.bf16.mxu0 0
  %410 = vmatpush1.bf16.msra.mxu0 %v393
  %411 = vmatprep.subr.bf16.mxu0 0
  %412 = vmatpush1.bf16.msra.mxu0 %v394
  %413 = vmatprep.subr.bf16.mxu0 0
  %414 = vmatpush1.bf16.msra.mxu0 %v395
  %415 = vmatprep.subr.bf16.mxu0 0
  %416 = vmatpush1.bf16.msra.mxu0 %v396
  %417 = vmatprep.subr.bf16.mxu0 0
  %418 = vmatpush1.bf16.msra.mxu0 %v397
  %419 = vmatprep.subr.bf16.mxu0 0
  %420 = vmatpush1.bf16.msra.mxu0 %v398
  %421 = vmatprep.subr.bf16.mxu0 0
  %422 = vmatpush1.bf16.msra.mxu0 %v399
  %423 = vmatprep.subr.bf16.mxu0 0
  %424 = vmatpush1.bf16.msra.mxu0 %v400
  %425 = vmatprep.subr.bf16.mxu0 0
  %426 = vmatpush1.bf16.msra.mxu0 0
  %427 = vmatprep.subr.bf16.mxu0 0
  %428 = vmatpush1.bf16.msra.mxu0 0
  %429 = vmatprep.subr.bf16.mxu0 0
  %430 = vmatpush1.bf16.msra.mxu0 0
  %431 = vmatprep.subr.bf16.mxu0 0
  %432 = vmatpush1.bf16.msra.mxu0 0
  %433 = vmatprep.subr.bf16.mxu0 0
  %434 = vmatpush1.bf16.msra.mxu0 0
  %435 = vmatprep.subr.bf16.mxu0 0
  %436 = vmatpush1.bf16.msra.mxu0 0
  %437 = vmatprep.subr.bf16.mxu0 0
  %438 = vmatpush1.bf16.msra.mxu0 0
  %439 = vmatprep.subr.bf16.mxu0 0
  %440 = vmatpush1.bf16.msra.mxu0 0
  %441 = vmatprep.mubr.bf16.mxu0 0
  %442 = vmatmul.mubr.bf16.gmra.mrb[0].mxu0 %v324
  %v443 = vpop.f32.mrb[0].mxu0
  %v444 = vadd.f32 %v360, %v443
  %v445 = vpop.f32.mrb[0].mxu0
  %v446 = vpop.f32.mrb[0].mxu0
  %v447 = vadd.f32 %v360, %v446
  %v448 = vpop.f32.mrb[0].mxu0
  %449 = vmatprep.mubr.bf16.mxu0 0
  %450 = vmatmul.mubr.bf16.gmra.mrb[0].mxu0 %v325
  %v451 = vpop.f32.mrb[0].mxu0
  %v452 = vadd.f32 %v360, %v451
  %v453 = vpop.f32.mrb[0].mxu0
  %v454 = vpop.f32.mrb[0].mxu0
  %v455 = vadd.f32 %v360, %v454
  %v456 = vpop.f32.mrb[0].mxu0
  %457 = vmatprep.mubr.bf16.mxu0 0
  %458 = vmatmul.mubr.bf16.gmra.mrb[0].mxu0 %v326
  %v459 = vpop.f32.mrb[0].mxu0
  %v460 = vadd.f32 %v360, %v459
  %v461 = vpop.f32.mrb[0].mxu0
  %v462 = vpop.f32.mrb[0].mxu0
  %v463 = vadd.f32 %v360, %v462
  %v464 = vpop.f32.mrb[0].mxu0
  %465 = vmatprep.mubr.bf16.mxu0 0
  %466 = vmatmul.mubr.bf16.gmra.mrb[0].mxu0 %v327
  %v467 = vpop.f32.mrb[0].mxu0
  %v468 = vadd.f32 %v360, %v467
  %v469 = vpop.f32.mrb[0].mxu0
  %v470 = vpop.f32.mrb[0].mxu0
  %v471 = vadd.f32 %v360, %v470
  %v472 = vpop.f32.mrb[0].mxu0
  %473 = vmatprep.mubr.bf16.mxu0 0
  %474 = vmatmul.mubr.bf16.gmra.mrb[0].mxu0 %v328
  %v475 = vpop.f32.mrb[0].mxu0
  %v476 = vadd.f32 %v360, %v475
  %v477 = vpop.f32.mrb[0].mxu0
  %v478 = vpop.f32.mrb[0].mxu0
  %v479 = vadd.f32 %v360, %v478
  %v480 = vpop.f32.mrb[0].mxu0
  %481 = vmatprep.mubr.bf16.mxu0 0
  %482 = vmatmul.mubr.bf16.gmra.mrb[0].mxu0 %v329
  %v483 = vpop.f32.mrb[0].mxu0
  %v484 = vadd.f32 %v360, %v483
  %v485 = vpop.f32.mrb[0].mxu0
  %v486 = vpop.f32.mrb[0].mxu0
  %v487 = vadd.f32 %v360, %v486
  %v488 = vpop.f32.mrb[0].mxu0
  %489 = vmatprep.mubr.bf16.mxu0 0
  %490 = vmatmul.mubr.bf16.gmra.mrb[0].mxu0 %v330
  %v491 = vpop.f32.mrb[0].mxu0
  %v492 = vadd.f32 %v360, %v491
  %v493 = vpop.f32.mrb[0].mxu0
  %v494 = vpop.f32.mrb[0].mxu0
  %v495 = vadd.f32 %v360, %v494
  %v496 = vpop.f32.mrb[0].mxu0
  %497 = vmatprep.mubr.bf16.mxu0 0
  %498 = vmatmul.mubr.bf16.gmra.mrb[0].mxu0 %v331
  %v499 = vpop.f32.mrb[0].mxu0
  %v500 = vadd.f32 %v360, %v499
  %v501 = vpop.f32.mrb[0].mxu0
  %v502 = vpop.f32.mrb[0].mxu0
  %v503 = vadd.f32 %v360, %v502
  %v504 = vpop.f32.mrb[0].mxu0
  %505 = vmatprep.mubr.bf16.mxu0 0
  %506 = vmatmul.mubr.bf16.gmra.mrb[0].mxu0 %v332
  %v507 = vpop.f32.mrb[0].mxu0
  %v508 = vadd.f32 %v360, %v507
  %v509 = vpop.f32.mrb[0].mxu0
  %v510 = vpop.f32.mrb[0].mxu0
  %v511 = vadd.f32 %v360, %v510
  %v512 = vpop.f32.mrb[0].mxu0
  %513 = vmatprep.mubr.bf16.mxu0 0
  %514 = vmatmul.mubr.bf16.gmra.mrb[0].mxu0 %v333
  %v515 = vpop.f32.mrb[0].mxu0
  %v516 = vadd.f32 %v360, %v515
  %v517 = vpop.f32.mrb[0].mxu0
  %v518 = vpop.f32.mrb[0].mxu0
  %v519 = vadd.f32 %v360, %v518
  %v520 = vpop.f32.mrb[0].mxu0
  %521 = vmatprep.mubr.bf16.mxu0 0
  %522 = vmatmul.mubr.bf16.gmra.mrb[0].mxu0 %v334
  %v523 = vpop.f32.mrb[0].mxu0
  %v524 = vadd.f32 %v360, %v523
  %v525 = vpop.f32.mrb[0].mxu0
  %v526 = vpop.f32.mrb[0].mxu0
  %v527 = vadd.f32 %v360, %v526
  %v528 = vpop.f32.mrb[0].mxu0
  %529 = vmatprep.mubr.bf16.mxu0 0
  %530 = vmatmul.mubr.bf16.gmra.mrb[0].mxu0 %v335
  %v531 = vpop.f32.mrb[0].mxu0
  %v532 = vadd.f32 %v360, %v531
  %v533 = vpop.f32.mrb[0].mxu0
  %v534 = vpop.f32.mrb[0].mxu0
  %v535 = vadd.f32 %v360, %v534
  %v536 = vpop.f32.mrb[0].mxu0
  %537 = vmatprep.mubr.bf16.mxu0 0
  %538 = vmatmul.mubr.bf16.gmra.mrb[0].mxu0 %v336
  %v539 = vpop.f32.mrb[0].mxu0
  %v540 = vadd.f32 %v360, %v539
  %v541 = vpop.f32.mrb[0].mxu0
  %v542 = vpop.f32.mrb[0].mxu0
  %v543 = vadd.f32 %v360, %v542
  %v544 = vpop.f32.mrb[0].mxu0
  %545 = vmatprep.mubr.bf16.mxu0 0
  %546 = vmatmul.mubr.bf16.gmra.mrb[0].mxu0 %v337
  %v547 = vpop.f32.mrb[0].mxu0
  %v548 = vadd.f32 %v360, %v547
  %v549 = vpop.f32.mrb[0].mxu0
  %v550 = vpop.f32.mrb[0].mxu0
  %v551 = vadd.f32 %v360, %v550
  %v552 = vpop.f32.mrb[0].mxu0
  %553 = vmatprep.mubr.bf16.mxu0 0
  %554 = vmatmul.mubr.bf16.gmra.mrb[0].mxu0 %v338
  %v555 = vpop.f32.mrb[0].mxu0
  %v556 = vadd.f32 %v360, %v555
  %v557 = vpop.f32.mrb[0].mxu0
  %v558 = vpop.f32.mrb[0].mxu0
  %v559 = vadd.f32 %v360, %v558
  %v560 = vpop.f32.mrb[0].mxu0
  %561 = vmatprep.mubr.bf16.mxu0 0
  %562 = vmatmul.mubr.bf16.gmra.mrb[0].mxu0 %v339
  %v563 = vpop.f32.mrb[0].mxu0
  %v564 = vadd.f32 %v360, %v563
  %v565 = vpop.f32.mrb[0].mxu0
  %v566 = vpop.f32.mrb[0].mxu0
  %v567 = vadd.f32 %v360, %v566
  %v568 = vpop.f32.mrb[0].mxu0
  %569 = vdwg.mxu0
  %v570 = vmax.f32 %v444, 0.0
  %v571 = vmax.f32 %v447, 0.0
  %v572 = vmax.f32 %v452, 0.0
  %v573 = vmax.f32 %v455, 0.0
  %v574 = vmax.f32 %v460, 0.0
  %v575 = vmax.f32 %v463, 0.0
  %v576 = vmax.f32 %v468, 0.0
  %v577 = vmax.f32 %v471, 0.0
  %v578 = vmax.f32 %v476, 0.0
  %v579 = vmax.f32 %v479, 0.0
  %v580 = vmax.f32 %v484, 0.0
  %v581 = vmax.f32 %v487, 0.0
  %v582 = vmax.f32 %v492, 0.0
  %v583 = vmax.f32 %v495, 0.0
  %v584 = vmax.f32 %v500, 0.0
  %v585 = vmax.f32 %v503, 0.0
  %v586 = vmax.f32 %v508, 0.0
  %v587 = vmax.f32 %v511, 0.0
  %v588 = vmax.f32 %v516, 0.0
  %v589 = vmax.f32 %v519, 0.0
  %v590 = vmax.f32 %v524, 0.0
  %v591 = vmax.f32 %v527, 0.0
  %v592 = vmax.f32 %v532, 0.0
  %v593 = vmax.f32 %v535, 0.0
  %v594 = vmax.f32 %v540, 0.0
  %v595 = vmax.f32 %v543, 0.0
  %v596 = vmax.f32 %v548, 0.0
  %v597 = vmax.f32 %v551, 0.0
  %v598 = vmax.f32 %v556, 0.0
  %v599 = vmax.f32 %v559, 0.0
  %v600 = vmax.f32 %v564, 0.0
  %v601 = vmax.f32 %v567, 0.0
  %v602 = vpack.c.bf16 %v571, %v570
  %v603 = vpack.c.bf16 %v573, %v572
  %v604 = vpack.c.bf16 %v575, %v574
  %v605 = vpack.c.bf16 %v577, %v576
  %v606 = vpack.c.bf16 %v579, %v578
  %v607 = vpack.c.bf16 %v581, %v580
  %v608 = vpack.c.bf16 %v583, %v582
  %v609 = vpack.c.bf16 %v585, %v584
  %v610 = vpack.c.bf16 %v587, %v586
  %v611 = vpack.c.bf16 %v589, %v588
  %v612 = vpack.c.bf16 %v591, %v590
  %v613 = vpack.c.bf16 %v593, %v592
  %v614 = vpack.c.bf16 %v595, %v594
  %v615 = vpack.c.bf16 %v597, %v596
  %v616 = vpack.c.bf16 %v599, %v598
  %v617 = vpack.c.bf16 %v601, %v600
  %v618 = vld [vmem:[%s3] sm:$0xf]
  %v619 = vld [vmem:[%s3 + $0x4] sm:$0xf]
  %v620 = vld [vmem:[%s3 + $0x8] sm:$0xf]
  %v621 = vld [vmem:[%s3 + $0xc] sm:$0xf]
  %v622 = vld [vmem:[%s3 + $0x10] sm:$0xf]
  %v623 = vld [vmem:[%s3 + $0x14] sm:$0xf]
  %v624 = vld [vmem:[%s3 + $0x18] sm:$0xf]
  %v625 = vld [vmem:[%s3 + $0x1c] sm:$0xf]
  %v626 = vld [vmem:[%s3 + $0x20] sm:$0xf]
  %v627 = vld [vmem:[%s3 + $0x24] sm:$0xf]
  %v628 = vld [vmem:[%s3 + $0x28] sm:$0xf]
  %v629 = vld [vmem:[%s3 + $0x2c] sm:$0xf]
  %v630 = vld [vmem:[%s3 + $0x30] sm:$0xf]
  %v631 = vld [vmem:[%s3 + $0x34] sm:$0xf]
  %v632 = vld [vmem:[%s3 + $0x38] sm:$0xf]
  %v633 = vld [vmem:[%s3 + $0x3c] sm:$0xf]
  %v634 = vld [vmem:[%s4 + $0x2] sm:$0x1]
  %v635 = vlaneseq
  %v636 = vshrl.u32 %v635, 7
  %v637 = vsub.s32 0, %v636
  %v638 = vrot.slane %v634, %v637
  %v655 = vunpack.c.l.b16 %v618
  %v656 = vunpack.c.l.b16 %v619
  %v657 = vunpack.c.l.b16 %v620
  %v658 = vunpack.c.l.b16 %v621
  %v659 = vunpack.c.l.b16 %v622
  %v660 = vunpack.c.l.b16 %v623
  %v661 = vunpack.c.l.b16 %v624
  %v662 = vunpack.c.l.b16 %v625
  %v663 = vunpack.c.l.b16 %v626
  %v664 = vunpack.c.l.b16 %v627
  %v665 = vunpack.c.l.b16 %v628
  %v666 = vunpack.c.l.b16 %v629
  %v667 = vunpack.c.l.b16 %v630
  %v668 = vunpack.c.l.b16 %v631
  %v669 = vunpack.c.l.b16 %v632
  %v670 = vunpack.c.l.b16 %v633
  %v671 = vpack.c.b16 %v656, %v655
  %v672 = vpack.c.b16 %v658, %v657
  %v673 = vpack.c.b16 %v660, %v659
  %v674 = vpack.c.b16 %v662, %v661
  %v675 = vpack.c.b16 %v664, %v663
  %v676 = vpack.c.b16 %v666, %v665
  %v677 = vpack.c.b16 %v668, %v667
  %v678 = vpack.c.b16 %v670, %v669
  %687 = vmatprep.subr.bf16.mxu0 0
  %688 = vmatpush1.bf16.msra.mxu0 %v671
  %689 = vmatprep.subr.bf16.mxu0 0
  %690 = vmatpush1.bf16.msra.mxu0 %v672
  %691 = vmatprep.subr.bf16.mxu0 0
  %692 = vmatpush1.bf16.msra.mxu0 %v673
  %693 = vmatprep.subr.bf16.mxu0 0
  %694 = vmatpush1.bf16.msra.mxu0 %v674
  %695 = vmatprep.subr.bf16.mxu0 0
  %696 = vmatpush1.bf16.msra.mxu0 %v675
  %697 = vmatprep.subr.bf16.mxu0 0
  %698 = vmatpush1.bf16.msra.mxu0 %v676
  %699 = vmatprep.subr.bf16.mxu0 0
  %700 = vmatpush1.bf16.msra.mxu0 %v677
  %701 = vmatprep.subr.bf16.mxu0 0
  %702 = vmatpush1.bf16.msra.mxu0 %v678
  %703 = vmatprep.subr.bf16.mxu0 0
  %704 = vmatpush1.bf16.msra.mxu0 0
  %705 = vmatprep.subr.bf16.mxu0 0
  %706 = vmatpush1.bf16.msra.mxu0 0
  %707 = vmatprep.subr.bf16.mxu0 0
  %708 = vmatpush1.bf16.msra.mxu0 0
  %709 = vmatprep.subr.bf16.mxu0 0
  %710 = vmatpush1.bf16.msra.mxu0 0
  %711 = vmatprep.subr.bf16.mxu0 0
  %712 = vmatpush1.bf16.msra.mxu0 0
  %713 = vmatprep.subr.bf16.mxu0 0
  %714 = vmatpush1.bf16.msra.mxu0 0
  %715 = vmatprep.subr.bf16.mxu0 0
  %716 = vmatpush1.bf16.msra.mxu0 0
  %717 = vmatprep.subr.bf16.mxu0 0
  %718 = vmatpush1.bf16.msra.mxu0 0
  %719 = vmatprep.mubr.bf16.mxu0 0
  %720 = vmatmul.mubr.bf16.gmra.mrb[0].mxu0 %v602
  %v721 = vpop.f32.mrb[0].mxu0
  %v722 = vadd.f32 %v638, %v721
  %v723 = vpop.f32.mrb[0].mxu0
  %v724 = vpop.f32.mrb[0].mxu0
  %v725 = vadd.f32 %v638, %v724
  %v726 = vpop.f32.mrb[0].mxu0
  %727 = vmatprep.mubr.bf16.mxu0 0
  %728 = vmatmul.mubr.bf16.gmra.mrb[0].mxu0 %v603
  %v729 = vpop.f32.mrb[0].mxu0
  %v730 = vadd.f32 %v638, %v729
  %v731 = vpop.f32.mrb[0].mxu0
  %v732 = vpop.f32.mrb[0].mxu0
  %v733 = vadd.f32 %v638, %v732
  %v734 = vpop.f32.mrb[0].mxu0
  %735 = vmatprep.mubr.bf16.mxu0 0
  %736 = vmatmul.mubr.bf16.gmra.mrb[0].mxu0 %v604
  %v737 = vpop.f32.mrb[0].mxu0
  %v738 = vadd.f32 %v638, %v737
  %v739 = vpop.f32.mrb[0].mxu0
  %v740 = vpop.f32.mrb[0].mxu0
  %v741 = vadd.f32 %v638, %v740
  %v742 = vpop.f32.mrb[0].mxu0
  %743 = vmatprep.mubr.bf16.mxu0 0
  %744 = vmatmul.mubr.bf16.gmra.mrb[0].mxu0 %v605
  %v745 = vpop.f32.mrb[0].mxu0
  %v746 = vadd.f32 %v638, %v745
  %v747 = vpop.f32.mrb[0].mxu0
  %v748 = vpop.f32.mrb[0].mxu0
  %v749 = vadd.f32 %v638, %v748
  %v750 = vpop.f32.mrb[0].mxu0
  %751 = vmatprep.mubr.bf16.mxu0 0
  %752 = vmatmul.mubr.bf16.gmra.mrb[0].mxu0 %v606
  %v753 = vpop.f32.mrb[0].mxu0
  %v754 = vadd.f32 %v638, %v753
  %v755 = vpop.f32.mrb[0].mxu0
  %v756 = vpop.f32.mrb[0].mxu0
  %v757 = vadd.f32 %v638, %v756
  %v758 = vpop.f32.mrb[0].mxu0
  %759 = vmatprep.mubr.bf16.mxu0 0
  %760 = vmatmul.mubr.bf16.gmra.mrb[0].mxu0 %v607
  %v761 = vpop.f32.mrb[0].mxu0
  %v762 = vadd.f32 %v638, %v761
  %v763 = vpop.f32.mrb[0].mxu0
  %v764 = vpop.f32.mrb[0].mxu0
  %v765 = vadd.f32 %v638, %v764
  %v766 = vpop.f32.mrb[0].mxu0
  %767 = vmatprep.mubr.bf16.mxu0 0
  %768 = vmatmul.mubr.bf16.gmra.mrb[0].mxu0 %v608
  %v769 = vpop.f32.mrb[0].mxu0
  %v770 = vadd.f32 %v638, %v769
  %v771 = vpop.f32.mrb[0].mxu0
  %v772 = vpop.f32.mrb[0].mxu0
  %v773 = vadd.f32 %v638, %v772
  %v774 = vpop.f32.mrb[0].mxu0
  %775 = vmatprep.mubr.bf16.mxu0 0
  %776 = vmatmul.mubr.bf16.gmra.mrb[0].mxu0 %v609
  %v777 = vpop.f32.mrb[0].mxu0
  %v778 = vadd.f32 %v638, %v777
  %v779 = vpop.f32.mrb[0].mxu0
  %v780 = vpop.f32.mrb[0].mxu0
  %v781 = vadd.f32 %v638, %v780
  %v782 = vpop.f32.mrb[0].mxu0
  %783 = vmatprep.mubr.bf16.mxu0 0
  %784 = vmatmul.mubr.bf16.gmra.mrb[0].mxu0 %v610
  %v785 = vpop.f32.mrb[0].mxu0
  %v786 = vadd.f32 %v638, %v785
  %v787 = vpop.f32.mrb[0].mxu0
  %v788 = vpop.f32.mrb[0].mxu0
  %v789 = vadd.f32 %v638, %v788
  %v790 = vpop.f32.mrb[0].mxu0
  %791 = vmatprep.mubr.bf16.mxu0 0
  %792 = vmatmul.mubr.bf16.gmra.mrb[0].mxu0 %v611
  %v793 = vpop.f32.mrb[0].mxu0
  %v794 = vadd.f32 %v638, %v793
  %v795 = vpop.f32.mrb[0].mxu0
  %v796 = vpop.f32.mrb[0].mxu0
  %v797 = vadd.f32 %v638, %v796
  %v798 = vpop.f32.mrb[0].mxu0
  %799 = vmatprep.mubr.bf16.mxu0 0
  %800 = vmatmul.mubr.bf16.gmra.mrb[0].mxu0 %v612
  %v801 = vpop.f32.mrb[0].mxu0
  %v802 = vadd.f32 %v638, %v801
  %v803 = vpop.f32.mrb[0].mxu0
  %v804 = vpop.f32.mrb[0].mxu0
  %v805 = vadd.f32 %v638, %v804
  %v806 = vpop.f32.mrb[0].mxu0
  %807 = vmatprep.mubr.bf16.mxu0 0
  %808 = vmatmul.mubr.bf16.gmra.mrb[0].mxu0 %v613
  %v809 = vpop.f32.mrb[0].mxu0
  %v810 = vadd.f32 %v638, %v809
  %v811 = vpop.f32.mrb[0].mxu0
  %v812 = vpop.f32.mrb[0].mxu0
  %v813 = vadd.f32 %v638, %v812
  %v814 = vpop.f32.mrb[0].mxu0
  %815 = vmatprep.mubr.bf16.mxu0 0
  %816 = vmatmul.mubr.bf16.gmra.mrb[0].mxu0 %v614
  %v817 = vpop.f32.mrb[0].mxu0
  %v818 = vadd.f32 %v638, %v817
  %v819 = vpop.f32.mrb[0].mxu0
  %v820 = vpop.f32.mrb[0].mxu0
  %v821 = vadd.f32 %v638, %v820
  %v822 = vpop.f32.mrb[0].mxu0
  %823 = vmatprep.mubr.bf16.mxu0 0
  %824 = vmatmul.mubr.bf16.gmra.mrb[0].mxu0 %v615
  %v825 = vpop.f32.mrb[0].mxu0
  %v826 = vadd.f32 %v638, %v825
  %v827 = vpop.f32.mrb[0].mxu0
  %v828 = vpop.f32.mrb[0].mxu0
  %v829 = vadd.f32 %v638, %v828
  %v830 = vpop.f32.mrb[0].mxu0
  %831 = vmatprep.mubr.bf16.mxu0 0
  %832 = vmatmul.mubr.bf16.gmra.mrb[0].mxu0 %v616
  %v833 = vpop.f32.mrb[0].mxu0
  %v834 = vadd.f32 %v638, %v833
  %v835 = vpop.f32.mrb[0].mxu0
  %v836 = vpop.f32.mrb[0].mxu0
  %v837 = vadd.f32 %v638, %v836
  %v838 = vpop.f32.mrb[0].mxu0
  %839 = vmatprep.mubr.bf16.mxu0 0
  %840 = vmatmul.mubr.bf16.gmra.mrb[0].mxu0 %v617
  %v841 = vpop.f32.mrb[0].mxu0
  %v842 = vadd.f32 %v638, %v841
  %v843 = vpop.f32.mrb[0].mxu0
  %v844 = vpop.f32.mrb[0].mxu0
  %v845 = vadd.f32 %v638, %v844
  %v846 = vpop.f32.mrb[0].mxu0
  %847 = vdwg.mxu0
  %848 = vst [vmem:[%s5] sm:$0xff] %v722
  %849 = vst [vmem:[%s5 + $0x8] sm:$0xff] %v725
  %850 = vst [vmem:[%s5 + $0x10] sm:$0xff] %v730
  %851 = vst [vmem:[%s5 + $0x18] sm:$0xff] %v733
  %852 = vst [vmem:[%s5 + $0x20] sm:$0xff] %v738
  %853 = vst [vmem:[%s5 + $0x28] sm:$0xff] %v741
  %854 = vst [vmem:[%s5 + $0x30] sm:$0xff] %v746
  %855 = vst [vmem:[%s5 + $0x38] sm:$0xff] %v749
  %856 = vst [vmem:[%s5 + $0x40] sm:$0xff] %v754
  %857 = vst [vmem:[%s5 + $0x48] sm:$0xff] %v757
  %858 = vst [vmem:[%s5 + $0x50] sm:$0xff] %v762
  %859 = vst [vmem:[%s5 + $0x58] sm:$0xff] %v765
  %860 = vst [vmem:[%s5 + $0x60] sm:$0xff] %v770
  %861 = vst [vmem:[%s5 + $0x68] sm:$0xff] %v773
  %862 = vst [vmem:[%s5 + $0x70] sm:$0xff] %v778
  %863 = vst [vmem:[%s5 + $0x78] sm:$0xff] %v781
  %864 = vst [vmem:[%s5 + $0x80] sm:$0xff] %v786
  %865 = vst [vmem:[%s5 + $0x88] sm:$0xff] %v789
  %866 = vst [vmem:[%s5 + $0x90] sm:$0xff] %v794
  %867 = vst [vmem:[%s5 + $0x98] sm:$0xff] %v797
  %868 = vst [vmem:[%s5 + $0xa0] sm:$0xff] %v802
  %869 = vst [vmem:[%s5 + $0xa8] sm:$0xff] %v805
  %870 = vst [vmem:[%s5 + $0xb0] sm:$0xff] %v810
  %871 = vst [vmem:[%s5 + $0xb8] sm:$0xff] %v813
  %872 = vst [vmem:[%s5 + $0xc0] sm:$0xff] %v818
  %873 = vst [vmem:[%s5 + $0xc8] sm:$0xff] %v821
  %874 = vst [vmem:[%s5 + $0xd0] sm:$0xff] %v826
  %875 = vst [vmem:[%s5 + $0xd8] sm:$0xff] %v829
  %876 = vst [vmem:[%s5 + $0xe0] sm:$0xff] %v834
  %877 = vst [vmem:[%s5 + $0xe8] sm:$0xff] %v837
  %878 = vst [vmem:[%s5 + $0xf0] sm:$0xff] %v842
  %879 = vst [vmem:[%s5 + $0xf8] sm:$0xff] %v845
  // Predicated region
  $region22: #{fcn_forward.1} parent=0 // pred_check
    _
  $region23: #{fcn_forward.1} parent=0 // pred_check_branch
    %881 = sbr.rel (0) target = $region25
  $region24: #{fcn_forward.1} parent=0 // pred_region
    _
  $region25: #{fcn_forward.1} parent=0 // pred_fallthru
    _
  // Predicated region
  $region26: #{fcn_forward.1} parent=0 // pred_check
    _
  $region27: #{fcn_forward.1} parent=0 // pred_check_branch
    %883 = sbr.rel (0) target = $region29
  $region28: #{fcn_forward.1} parent=0 // pred_region
    _
  $region29: #{fcn_forward.1} parent=0 // pred_fallthru
    _

</llo_original>
